<compile_context>
chip_gen: v5e
topology: v5e:2x2
jax: 0.10.0
libtpu: 0.0.40
codegen_flags: <defaults>
</compile_context>

<pallas_src>
import functools

import jax
import jax.numpy as jnp
from jax import lax
from jax.experimental import pallas as pl
from jax.experimental.pallas import tpu as pltpu


# ------------------------------ helpers -------------------------------------


def _round_up(x, m):
    return ((x + m - 1) // m) * m


def _vmem_capacity_bytes():
    """Physical VMEM per core; conservative fallback = v7x (64 MiB)."""
    try:
        return int(pltpu.get_tpu_info().vmem_capacity_bytes)
    except Exception:
        return 64 * 1024 * 1024


def _choose_tiles(n):
    # Bigger tiles amortize the ~0.35us/grid-step overhead; VMEM use is bounded
    # by an explicit vmem_limit_bytes (safe even on v5e's 16 MiB default scoped
    # budget).  n_pad is a multiple of 2*tm so gi >= 2 (v7x megacore sharding).
    if n <= 4096:
        tm, tk = 512, 1024
    else:
        tm, tk = 1024, 2048
    n_pad = _round_up(n, max(2 * tm, tk))
    return n_pad, tm, tk


# --------------------------- fused (resident-A) kernel -----------------------


def _fused_kernel(a_ref, x_ref, w1_ref, b1_ref, w2_ref, b2_ref, w3_ref,
                  b3_ref, wf_ref, bf_ref, o_ref):
    """Whole GCN forward with A_hat resident in VMEM (read from HBM once)."""
    a = a_ref[...]                                              # bf16 (n, n)
    ax = jnp.dot(a, x_ref[...], preferred_element_type=jnp.float32)
    h1 = jnp.maximum(
        jnp.dot(ax.astype(jnp.bfloat16), w1_ref[...],
                preferred_element_type=jnp.float32) + b1_ref[...], 0.0)
    t2 = jnp.dot(h1.astype(jnp.bfloat16), w2_ref[...],
                 preferred_element_type=jnp.float32).astype(jnp.bfloat16)
    h2 = jnp.maximum(jnp.dot(a, t2, preferred_element_type=jnp.float32)
                     + b2_ref[...], 0.0)
    t3 = jnp.dot(h2.astype(jnp.bfloat16), w3_ref[...],
                 preferred_element_type=jnp.float32).astype(jnp.bfloat16)
    h3 = jnp.maximum(jnp.dot(a, t3, preferred_element_type=jnp.float32)
                     + b3_ref[...], 0.0)
    # TODO(synk): Dropout(0.4) is eval-mode identity; training would draw a mask
    # via pltpu.prng_seed / pltpu.prng_random_bits here.
    z = jnp.dot(h3.astype(jnp.bfloat16), wf_ref[...],
                preferred_element_type=jnp.float32) + bf_ref[...]
    o_ref[...] = jnp.where(z > 0, z, 0.2 * z)                   # LeakyReLU(0.2)


# ------------------------------ tiled kernels --------------------------------


def _agg_first_kernel(mask_ref, cols_ref, a_ref, x_ref, w1_ref, b1_ref, w2_ref,
                      o_ref, acc_ref, *, tk, t_resident):
    """conv1: relu((A@X)@W1 + b1) fused with the conv2 transform (@W2)."""
    del cols_ref                                      # used only in index_maps
    i = pl.program_id(0)
    k = pl.program_id(1)
    nk = pl.num_programs(1)

    @pl.when(k == 0)
    def _():
        acc_ref[...] = jnp.zeros_like(acc_ref)

    @pl.when(mask_ref[i * nk + k] != 0)
    def _():
        if t_resident:
            t = x_ref[pl.ds(pl.multiple_of(k * tk, tk), tk), :]
        else:
            t = x_ref[...]
        acc_ref[...] += jnp.dot(a_ref[...], t, preferred_element_type=jnp.float32)

    @pl.when(k == nk - 1)
    def _():
        ax = acc_ref[...]
        h1 = jnp.maximum(
            jnp.dot(ax.astype(jnp.bfloat16), w1_ref[...],
                    preferred_element_type=jnp.float32) + b1_ref[...], 0.0)
        o_ref[...] = jnp.dot(h1.astype(jnp.bfloat16), w2_ref[...],
                             preferred_element_type=jnp.float32
                             ).astype(o_ref.dtype)


def _agg_mid_kernel(mask_ref, cols_ref, a_ref, t_ref, b_ref, wn_ref,
                    o_ref, acc_ref, *, tk, t_resident):
    """conv_l: relu(A@T_l + b_l) fused with the next layer's transform."""
    del cols_ref
    i = pl.program_id(0)
    k = pl.program_id(1)
    nk = pl.num_programs(1)

    @pl.when(k == 0)
    def _():
        acc_ref[...] = jnp.zeros_like(acc_ref)

    @pl.when(mask_ref[i * nk + k] != 0)
    def _():
        if t_resident:
            t = t_ref[pl.ds(pl.multiple_of(k * tk, tk), tk), :]
        else:
            t = t_ref[...]
        acc_ref[...] += jnp.dot(a_ref[...], t, preferred_element_type=jnp.float32)

    @pl.when(k == nk - 1)
    def _():
        h = jnp.maximum(acc_ref[...] + b_ref[...], 0.0)
        o_ref[...] = jnp.dot(h.astype(jnp.bfloat16), wn_ref[...],
                             preferred_element_type=jnp.float32
                             ).astype(o_ref.dtype)


def _agg_head_kernel(mask_ref, cols_ref, a_ref, t_ref, b_ref, wf_ref, bf_ref,
                     o_ref, acc_ref, *, tk, t_resident):
    """conv3: relu(A@T3 + b3), dropout(eval=id), fc3 + LeakyReLU(0.2)."""
    del cols_ref
    i = pl.program_id(0)
    k = pl.program_id(1)
    nk = pl.num_programs(1)

    @pl.when(k == 0)
    def _():
        acc_ref[...] = jnp.zeros_like(acc_ref)

    @pl.when(mask_ref[i * nk + k] != 0)
    def _():
        if t_resident:
            t = t_ref[pl.ds(pl.multiple_of(k * tk, tk), tk), :]
        else:
            t = t_ref[...]
        acc_ref[...] += jnp.dot(a_ref[...], t, preferred_element_type=jnp.float32)

    @pl.when(k == nk - 1)
    def _():
        h = jnp.maximum(acc_ref[...] + b_ref[...], 0.0)
        # TODO(synk): Dropout(0.4) is eval-mode identity here.
        z = jnp.dot(h.astype(jnp.bfloat16), wf_ref[...],
                    preferred_element_type=jnp.float32) + bf_ref[...]
        o_ref[...] = jnp.where(z > 0, z, 0.2 * z)


# --------------------------- pallas_call glue --------------------------------


def _agg_call(kernel, a_pad, t_pad, extras, *, out_feat, out_dtype, tm, tk,
              mask, cols, vmem_cap):
    n_pad = a_pad.shape[0]
    f_t = t_pad.shape[1]
    gi, gk = n_pad // tm, n_pad // tk

    # Keep T fully resident in VMEM when it fits (eliminates gi-fold re-reads).
    t_resident = 2 * n_pad * f_t * 2 <= max(4 * 2**20, vmem_cap // 8)
    bound_kernel = functools.partial(kernel, tk=tk, t_resident=t_resident)

    # Empty (TM, TK) blocks re-use the previously fetched column-block index
    # (cols), so the pipeline dedups the DMA; the in-kernel mask gates the MXU.
    def a_index(i, k, m, c):
        return (i, c[i * gk + k])

    a_spec = pl.BlockSpec((tm, tk), a_index)
    if hasattr(pl, "Buffered"):
        try:  # deeper buffering hides the irregular (mask-skipped) A fetches
            a_spec = pl.BlockSpec((tm, tk), a_index, pipeline_mode=pl.Buffered(3))
        except TypeError:
            pass

    if t_resident:
        t_spec = pl.BlockSpec((n_pad, f_t), lambda i, k, m, c: (0, 0))
    else:
        t_spec = pl.BlockSpec((tk, f_t), lambda i, k, m, c: (c[i * gk + k], 0))

    in_specs = [a_spec, t_spec]
    in_specs += [pl.BlockSpec(e.shape, lambda i, k, m, c: (0, 0)) for e in extras]

    out_bytes = jnp.dtype(out_dtype).itemsize
    extras_bytes = sum(int(e.size) * e.dtype.itemsize for e in extras)
    need = (3 * tm * tk * 2
            + (2 * n_pad * f_t * 2 if t_resident else 2 * tk * f_t * 2)
            + tm * f_t * 4                       # f32 accumulator scratch
            + 2 * tm * out_feat * out_bytes
            + 2 * extras_bytes)
    vmem_limit = int(min(0.9 * vmem_cap, max(32 * 2**20, 2 * need)))

    flops = 2 * n_pad * n_pad * f_t + 4 * n_pad * f_t * out_feat
    bytes_accessed = int(n_pad * n_pad * 2                       # A (bf16)
                         + (1 if t_resident else gi) * n_pad * f_t * 2
                         + n_pad * out_feat * out_bytes
                         + extras_bytes)

    return pl.pallas_call(
        bound_kernel,
        out_shape=jax.ShapeDtypeStruct((n_pad, out_feat), out_dtype),
        grid_spec=pltpu.PrefetchScalarGridSpec(
            num_scalar_prefetch=2,               # block mask + dedup col index
            grid=(gi, gk),
            in_specs=in_specs,
            out_specs=pl.BlockSpec((tm, out_feat), lambda i, k, m, c: (i, 0)),
            scratch_shapes=[pltpu.VMEM((tm, f_t), jnp.float32)],
        ),
        compiler_params=pltpu.CompilerParams(
            dimension_semantics=("parallel", "arbitrary"),
            vmem_limit_bytes=vmem_limit),
        cost_estimate=pl.CostEstimate(
            flops=flops, transcendentals=0, bytes_accessed=bytes_accessed),
    )(mask, cols, a_pad, t_pad, *extras)


# --------------------------- graph preprocessing -----------------------------


def gcn_norm_dense(edge_index, edge_attr, num_nodes, n_pad=None):
    """PyG GCNConv normalization (normalize=True, add_self_loops=True), dense.

    A_hat is scattered directly into an (n_pad, n_pad) zero buffer so no extra
    N^2 padding pass is needed.  Also returns the (src, dst) index arrays
    (with self loops) for O(E) block-occupancy mask construction.
    """
    if n_pad is None:
        n_pad = num_nodes
    w = jnp.maximum(edge_attr.astype(jnp.float32), 0.0)     # torch.clamp(min=0)
    row, col = edge_index[0], edge_index[1]                 # row=source, col=target
    self_mask = row == col
    # add_remaining_self_loops: drop existing self loops, re-add one canonical
    # self loop per node (weight = existing weight if present, else 1).
    w_kept = jnp.where(self_mask, 0.0, w)
    loop_w = jnp.ones((num_nodes,), jnp.float32)
    loop_w = loop_w.at[jnp.where(self_mask, row, num_nodes)].set(w, mode="drop")
    loop = jnp.arange(num_nodes, dtype=row.dtype)
    row_all = jnp.concatenate([row, loop])
    col_all = jnp.concatenate([col, loop])
    w_all = jnp.concatenate([w_kept, loop_w])
    deg = jnp.zeros((num_nodes,), jnp.float32).at[col_all].add(w_all)
    dinv = jnp.where(deg > 0, lax.rsqrt(deg), 0.0)
    norm = dinv[row_all] * w_all * dinv[col_all]
    # out[i] = sum over edges (j -> i) of norm * x[j]  =>  A_hat[i, j] += norm
    a_hat = jnp.zeros((n_pad, n_pad), jnp.float32).at[col_all, row_all].add(norm)
    return a_hat, row_all, col_all


def _block_mask_from_edges(row_all, col_all, n_pad, tm, tk):
    """O(E) per-(row-tile, col-tile) occupancy mask + DMA-dedup column index."""
    gi, gk = n_pad // tm, n_pad // tk
    bi = (col_all // tm).astype(jnp.int32)          # A row-block (target node)
    bk = (row_all // tk).astype(jnp.int32)          # A col-block (source node)
    occ = jnp.zeros((gi * gk,), jnp.int32).at[bi * gk + bk].add(1, mode="drop")
    mask = (occ > 0).astype(jnp.int32)
    # For empty blocks, point at the last non-empty column-block in the same
    # row tile so consecutive grid steps fetch the same A tile (DMA deduped).
    kidx = jnp.broadcast_to(jnp.arange(gk, dtype=jnp.int32)[None, :], (gi, gk))
    last = lax.cummax(jnp.where(mask.reshape(gi, gk) > 0, kidx, -1), axis=1)
    cols = jnp.maximum(last, 0).reshape(-1).astype(jnp.int32)
    return mask, cols


# ------------------------------ forward pass ---------------------------------


def init_params(key, input_dim, output_dim):
    dims = [(input_dim, 256), (256, 128), (128, 64), (64, output_dim)]
    ks = jax.random.split(key, 2 * len(dims))
    params = []
    for idx, (fi, fo) in enumerate(dims):
        lim = (6.0 / (fi + fo)) ** 0.5
        params.append(jax.random.uniform(ks[2 * idx], (fi, fo), jnp.float32,
                                         -lim, lim))        # weight = lin.weight.T
        params.append(jax.random.uniform(ks[2 * idx + 1], (fo,), jnp.float32,
                                         -0.1, 0.1))        # bias
    return params                                           # [w1,b1,w2,b2,w3,b3,wf,bf]


def gcn_forward(x, edge_index, edge_attr, params, force_tiled=False):
    n, f_in = x.shape
    w1, b1, w2, b2, w3, b3, wf, bf = params
    f1, f2, f3, f_out = w1.shape[1], w2.shape[1], w3.shape[1], wf.shape[1]

    vmem_cap = _vmem_capacity_bytes()

    f_in_pad = _round_up(f_in, 128)
    f3_pad = _round_up(f3, 128)
    f_out_pad = _round_up(f_out, 128)                        # lane-dense head

    # ---- pad / cast parameters (zero padding keeps the math exact) ----
    w1p = jnp.zeros((f_in_pad, f1), jnp.bfloat16).at[:f_in, :].set(w1.astype(jnp.bfloat16))
    b1p = b1.reshape(1, f1).astype(jnp.float32)
    w2p = w2.astype(jnp.bfloat16)
    b2p = b2.reshape(1, f2).astype(jnp.float32)
    w3p = jnp.zeros((f2, f3_pad), jnp.bfloat16).at[:, :f3].set(w3.astype(jnp.bfloat16))
    b3p = jnp.zeros((1, f3_pad), jnp.float32).at[:, :f3].set(b3.reshape(1, f3))
    wfp = jnp.zeros((f3_pad, f_out_pad), jnp.bfloat16).at[:f3, :f_out].set(
        wf.astype(jnp.bfloat16))
    bfp = jnp.zeros((1, f_out_pad), jnp.float32).at[:, :f_out].set(bf.reshape(1, f_out))

    # ---- resident-A single-call fusion for small / moderate N ----
    n_pad_fused = _round_up(n, 128)
    use_fused = (not force_tiled) and (n_pad_fused * n_pad_fused * 2 <= vmem_cap // 6)

    if use_fused:
        n_pad = n_pad_fused
        a_hat, _, _ = gcn_norm_dense(edge_index, edge_attr, n, n_pad)
        a_bf = a_hat.astype(jnp.bfloat16)
        x_pad = jnp.zeros((n_pad, f_in_pad), jnp.bfloat16).at[:n, :f_in].set(
            x.astype(jnp.bfloat16))

        flops = (2 * n_pad * n_pad * (f_in_pad + f2 + f3_pad)
                 + 2 * n_pad * (f_in_pad * f1 + f1 * f2 + f2 * f3_pad
                                + f3_pad * f_out_pad))
        w_bytes = sum(int(p.size) * p.dtype.itemsize
                      for p in (w1p, b1p, w2p, b2p, w3p, b3p, wfp, bfp))
        bytes_accessed = int(2 * n_pad * n_pad + 2 * n_pad * f_in_pad
                             + 4 * n_pad * f_out_pad + w_bytes)
        need = 2 * n_pad * n_pad + 4096 * n_pad + 2 * w_bytes
        vmem_limit = int(min(0.9 * vmem_cap, max(32 * 2**20, 2 * need)))

        out = pl.pallas_call(
            _fused_kernel,
            out_shape=jax.ShapeDtypeStruct((n_pad, f_out_pad), jnp.float32),
            compiler_params=pltpu.CompilerParams(vmem_limit_bytes=vmem_limit),
            cost_estimate=pl.CostEstimate(
                flops=flops, transcendentals=0, bytes_accessed=bytes_accessed),
        )(a_bf, x_pad, w1p, b1p, w2p, b2p, w3p, b3p, wfp, bfp)
        return out[:n, :f_out]

    # ---- tiled path for large N ----
    n_pad, tm, tk = _choose_tiles(n)
    a_hat, row_all, col_all = gcn_norm_dense(edge_index, edge_attr, n, n_pad)
    a_bf = a_hat.astype(jnp.bfloat16)
    mask, cols = _block_mask_from_edges(row_all, col_all, n_pad, tm, tk)
    x_pad = jnp.zeros((n_pad, f_in_pad), jnp.bfloat16).at[:n, :f_in].set(
        x.astype(jnp.bfloat16))

    # conv1 (+ fused conv2 transform)
    t2 = _agg_call(_agg_first_kernel, a_bf, x_pad, (w1p, b1p, w2p),
                   out_feat=f2, out_dtype=jnp.bfloat16, tm=tm, tk=tk,
                   mask=mask, cols=cols, vmem_cap=vmem_cap)
    # conv2 (+ fused conv3 transform)
    t3 = _agg_call(_agg_mid_kernel, a_bf, t2, (b2p, w3p),
                   out_feat=f3_pad, out_dtype=jnp.bfloat16, tm=tm, tk=tk,
                   mask=mask, cols=cols, vmem_cap=vmem_cap)
    # conv3 + dropout(eval) + fc3 + LeakyReLU(0.2)
    out = _agg_call(_agg_head_kernel, a_bf, t3, (b3p, wfp, bfp),
                    out_feat=f_out_pad, out_dtype=jnp.float32, tm=tm, tk=tk,
                    mask=mask, cols=cols, vmem_cap=vmem_cap)
    return out[:n, :f_out]


def gcn_reference(x, a_hat, params):
    w1, b1, w2, b2, w3, b3, wf, bf = params
    h = jnp.maximum(a_hat @ (x @ w1) + b1, 0.0)
    h = jnp.maximum(a_hat @ (h @ w2) + b2, 0.0)
    h = jnp.maximum(a_hat @ (h @ w3) + b3, 0.0)
    z = h @ wf + bf
    return jnp.where(z > 0, z, 0.2 * z)


if __name__ == "__main__":
    key = jax.random.PRNGKey(0)
    input_dim, output_dim = 16, 10

    # ---- small graph: exercises the resident-A fused single-call path ----
    N, E = 32, 64
    kx, ks, kd, kw, kp = jax.random.split(key, 5)
    x = jax.random.normal(kx, (N, input_dim), jnp.float32)
    src = jax.random.randint(ks, (E,), 0, N, dtype=jnp.int32)
    dst = jax.random.randint(kd, (E,), 0, N, dtype=jnp.int32)
    edge_index = jnp.stack([src, dst])                       # (2, E)
    edge_attr = jax.random.normal(kw, (E,), jnp.float32)
    params = init_params(kp, input_dim, output_dim)

    out = jax.jit(gcn_forward)(x, edge_index, edge_attr, params)
    jax.block_until_ready(out)
    assert out.shape == (N, output_dim)
    assert not bool(jnp.isnan(out).any())
    ref = gcn_reference(x, gcn_norm_dense(edge_index, edge_attr, N)[0], params)
    err = float(jnp.max(jnp.abs(out - ref)))
    assert err < 1.5e-1, f"fused path: max abs error vs f32 reference: {err}"

    # ---- larger graph: exercises the tiled / DMA-skipping path ----
    N2, E2 = 1500, 6000
    k2 = jax.random.split(jax.random.PRNGKey(1), 4)
    x2 = jax.random.normal(k2[0], (N2, input_dim), jnp.float32)
    src2 = jax.random.randint(k2[1], (E2,), 0, N2, dtype=jnp.int32)
    dst2 = jax.random.randint(k2[2], (E2,), 0, N2, dtype=jnp.int32)
    edge_index2 = jnp.stack([src2, dst2])
    edge_attr2 = jax.random.normal(k2[3], (E2,), jnp.float32)

    tiled_fwd = jax.jit(lambda a, b, c, d: gcn_forward(a, b, c, d, force_tiled=True))
    out2 = tiled_fwd(x2, edge_index2, edge_attr2, params)
    jax.block_until_ready(out2)
    assert out2.shape == (N2, output_dim)
    assert not bool(jnp.isnan(out2).any())
    ref2 = gcn_reference(x2, gcn_norm_dense(edge_index2, edge_attr2, N2)[0], params)
    err2 = float(jnp.max(jnp.abs(out2 - ref2)))
    assert err2 < 1.5e-1, f"tiled path: max abs error vs f32 reference: {err2}"

    print("KERNEL_OK")
</pallas_src>

<mosaic_0001>
module attributes {stable_mosaic.version = 11 : i64} {
  func.func @_fused_kernel(%arg0: memref<128x128xbf16, #tpu.memory_space<vmem>>, %arg1: memref<128x128xbf16, #tpu.memory_space<vmem>>, %arg2: memref<128x256xbf16, #tpu.memory_space<vmem>>, %arg3: memref<1x256xf32, #tpu.memory_space<vmem>>, %arg4: memref<256x128xbf16, #tpu.memory_space<vmem>>, %arg5: memref<1x128xf32, #tpu.memory_space<vmem>>, %arg6: memref<128x128xbf16, #tpu.memory_space<vmem>>, %arg7: memref<1x128xf32, #tpu.memory_space<vmem>>, %arg8: memref<128x128xbf16, #tpu.memory_space<vmem>>, %arg9: memref<1x128xf32, #tpu.memory_space<vmem>>, %arg10: memref<128x128xf32, #tpu.memory_space<vmem>>) attributes {dimension_semantics = [], scalar_prefetch = 0 : i64, scratch_operands = 0 : i64, tpu.core_type = #tpu.core_type<tc>} {
    %c0 = arith.constant 0 : index
    %c0_0 = arith.constant 0 : index
    %0 = vector.load %arg0[%c0, %c0_0] : memref<128x128xbf16, #tpu.memory_space<vmem>>, vector<128x128xbf16>
    %c0_1 = arith.constant 0 : index
    %c0_2 = arith.constant 0 : index
    %1 = vector.load %arg1[%c0_1, %c0_2] : memref<128x128xbf16, #tpu.memory_space<vmem>>, vector<128x128xbf16>
    %cst = arith.constant dense<0.000000e+00> : vector<128x128xf32>
    %2 = tpu.matmul %0, %1, %cst {dimension_numbers = #tpu.dot_dimension_numbers<[1], [0], [0], [1], [0, 0, 1, 1], [], []>} : vector<128x128xbf16>, vector<128x128xbf16>, vector<128x128xf32> -> vector<128x128xf32>
    %3 = arith.truncf %2 : vector<128x128xf32> to vector<128x128xbf16>
    %c0_3 = arith.constant 0 : index
    %c0_4 = arith.constant 0 : index
    %4 = vector.load %arg2[%c0_3, %c0_4] : memref<128x256xbf16, #tpu.memory_space<vmem>>, vector<128x256xbf16>
    %cst_5 = arith.constant dense<0.000000e+00> : vector<128x256xf32>
    %5 = tpu.matmul %3, %4, %cst_5 {dimension_numbers = #tpu.dot_dimension_numbers<[1], [0], [0], [1], [0, 0, 1, 1], [], []>} : vector<128x128xbf16>, vector<128x256xbf16>, vector<128x256xf32> -> vector<128x256xf32>
    %c0_6 = arith.constant 0 : index
    %c0_7 = arith.constant 0 : index
    %6 = vector.load %arg3[%c0_6, %c0_7] : memref<1x256xf32, #tpu.memory_space<vmem>>, vector<1x256xf32>
    %7 = vector.broadcast %6 : vector<1x256xf32> to vector<128x256xf32>
    %8 = arith.addf %5, %7 : vector<128x256xf32>
    %cst_8 = arith.constant 0.000000e+00 : f32
    %9 = vector.broadcast %cst_8 : f32 to vector<128x256xf32>
    %10 = arith.maximumf %8, %9 : vector<128x256xf32>
    %11 = arith.truncf %10 : vector<128x256xf32> to vector<128x256xbf16>
    %c0_9 = arith.constant 0 : index
    %c0_10 = arith.constant 0 : index
    %12 = vector.load %arg4[%c0_9, %c0_10] : memref<256x128xbf16, #tpu.memory_space<vmem>>, vector<256x128xbf16>
    %cst_11 = arith.constant dense<0.000000e+00> : vector<128x128xf32>
    %13 = tpu.matmul %11, %12, %cst_11 {dimension_numbers = #tpu.dot_dimension_numbers<[1], [0], [0], [1], [0, 0, 1, 1], [], []>} : vector<128x256xbf16>, vector<256x128xbf16>, vector<128x128xf32> -> vector<128x128xf32>
    %14 = arith.truncf %13 : vector<128x128xf32> to vector<128x128xbf16>
    %cst_12 = arith.constant dense<0.000000e+00> : vector<128x128xf32>
    %15 = tpu.matmul %0, %14, %cst_12 {dimension_numbers = #tpu.dot_dimension_numbers<[1], [0], [0], [1], [0, 0, 1, 1], [], []>} : vector<128x128xbf16>, vector<128x128xbf16>, vector<128x128xf32> -> vector<128x128xf32>
    %c0_13 = arith.constant 0 : index
    %c0_14 = arith.constant 0 : index
    %16 = vector.load %arg5[%c0_13, %c0_14] : memref<1x128xf32, #tpu.memory_space<vmem>>, vector<1x128xf32>
    %17 = vector.broadcast %16 : vector<1x128xf32> to vector<128x128xf32>
    %18 = arith.addf %15, %17 : vector<128x128xf32>
    %cst_15 = arith.constant 0.000000e+00 : f32
    %19 = vector.broadcast %cst_15 : f32 to vector<128x128xf32>
    %20 = arith.maximumf %18, %19 : vector<128x128xf32>
    %21 = arith.truncf %20 : vector<128x128xf32> to vector<128x128xbf16>
    %c0_16 = arith.constant 0 : index
    %c0_17 = arith.constant 0 : index
    %22 = vector.load %arg6[%c0_16, %c0_17] : memref<128x128xbf16, #tpu.memory_space<vmem>>, vector<128x128xbf16>
    %cst_18 = arith.constant dense<0.000000e+00> : vector<128x128xf32>
    %23 = tpu.matmul %21, %22, %cst_18 {dimension_numbers = #tpu.dot_dimension_numbers<[1], [0], [0], [1], [0, 0, 1, 1], [], []>} : vector<128x128xbf16>, vector<128x128xbf16>, vector<128x128xf32> -> vector<128x128xf32>
    %24 = arith.truncf %23 : vector<128x128xf32> to vector<128x128xbf16>
    %cst_19 = arith.constant dense<0.000000e+00> : vector<128x128xf32>
    %25 = tpu.matmul %0, %24, %cst_19 {dimension_numbers = #tpu.dot_dimension_numbers<[1], [0], [0], [1], [0, 0, 1, 1], [], []>} : vector<128x128xbf16>, vector<128x128xbf16>, vector<128x128xf32> -> vector<128x128xf32>
    %c0_20 = arith.constant 0 : index
    %c0_21 = arith.constant 0 : index
    %26 = vector.load %arg7[%c0_20, %c0_21] : memref<1x128xf32, #tpu.memory_space<vmem>>, vector<1x128xf32>
    %27 = vector.broadcast %26 : vector<1x128xf32> to vector<128x128xf32>
    %28 = arith.addf %25, %27 : vector<128x128xf32>
    %cst_22 = arith.constant 0.000000e+00 : f32
    %29 = vector.broadcast %cst_22 : f32 to vector<128x128xf32>
    %30 = arith.maximumf %28, %29 : vector<128x128xf32>
    %31 = arith.truncf %30 : vector<128x128xf32> to vector<128x128xbf16>
    %c0_23 = arith.constant 0 : index
    %c0_24 = arith.constant 0 : index
    %32 = vector.load %arg8[%c0_23, %c0_24] : memref<128x128xbf16, #tpu.memory_space<vmem>>, vector<128x128xbf16>
    %cst_25 = arith.constant dense<0.000000e+00> : vector<128x128xf32>
    %33 = tpu.matmul %31, %32, %cst_25 {dimension_numbers = #tpu.dot_dimension_numbers<[1], [0], [0], [1], [0, 0, 1, 1], [], []>} : vector<128x128xbf16>, vector<128x128xbf16>, vector<128x128xf32> -> vector<128x128xf32>
    %c0_26 = arith.constant 0 : index
    %c0_27 = arith.constant 0 : index
    %34 = vector.load %arg9[%c0_26, %c0_27] : memref<1x128xf32, #tpu.memory_space<vmem>>, vector<1x128xf32>
    %35 = vector.broadcast %34 : vector<1x128xf32> to vector<128x128xf32>
    %36 = arith.addf %33, %35 : vector<128x128xf32>
    %cst_28 = arith.constant 0.000000e+00 : f32
    %37 = vector.broadcast %cst_28 : f32 to vector<128x128xf32>
    %38 = arith.cmpf ogt, %36, %37 : vector<128x128xf32>
    %cst_29 = arith.constant 2.000000e-01 : f32
    %39 = vector.broadcast %cst_29 : f32 to vector<128x128xf32>
    %40 = arith.mulf %39, %36 : vector<128x128xf32>
    %41 = arith.select %38, %36, %40 : vector<128x128xi1>, vector<128x128xf32>
    %c0_30 = arith.constant 0 : index
    %c0_31 = arith.constant 0 : index
    %42 = vector.load %arg10[%c0_30, %c0_31] : memref<128x128xf32, #tpu.memory_space<vmem>>, vector<128x128xf32>
    tpu.vector_store %arg10[%c0_30, %c0_31], %41 {strides = array<i32>} : memref<128x128xf32, #tpu.memory_space<vmem>>, vector<128x128xf32>,
    return
  }
}

</mosaic_0001>

<llo_original>
// kernel: gcn_forward.1
$region0: #{gcn_forward.1}
  #allocation0 [shape = 'u32[]', space=smem, size = 0x4, offset = 0x4, fixed_abs, tag = 'smem constant byte address 0x4 - core index']
  #allocation1 [shape = 'u32[72,128]{1,0:T(1,128)}', space=vmem, size = 0x9000, scoped, tag = 'internal scratch']
  %s0 = inlined_call_operand.vmem [shape: bf16[128,128], index: 0, kind: input, shape index: {}]
  %s1 = inlined_call_operand.vmem [shape: bf16[128,128], index: 1, kind: input, shape index: {}]
  %s2 = inlined_call_operand.vmem [shape: bf16[128,256], index: 2, kind: input, shape index: {}]
  %s3 = inlined_call_operand.vmem [shape: f32[1,256], index: 3, kind: input, shape index: {}]
  %s4 = inlined_call_operand.vmem [shape: bf16[256,128], index: 4, kind: input, shape index: {}]
  %s5 = inlined_call_operand.vmem [shape: f32[1,128], index: 5, kind: input, shape index: {}]
  %s6 = inlined_call_operand.vmem [shape: bf16[128,128], index: 6, kind: input, shape index: {}]
  %s7 = inlined_call_operand.vmem [shape: f32[1,128], index: 7, kind: input, shape index: {}]
  %s8 = inlined_call_operand.vmem [shape: bf16[128,128], index: 8, kind: input, shape index: {}]
  %s9 = inlined_call_operand.vmem [shape: f32[1,128], index: 9, kind: input, shape index: {}]
  %s10 = inlined_call_operand.vmem [shape: f32[128,128], index: 10, kind: output, shape index: {}]
  %s11 = sld [smem:[#allocation0]]
  $region50: #{gcn_forward.1} parent=0
    _
  %s13 = ssub.s32 1, %s11
  %s14 = scalar_select 0, %s13, %s11
  // Predicated region
  $region2: #{gcn_forward.1} parent=0 // pred_check
    _
  $region3: #{gcn_forward.1} parent=0 // pred_check_branch
    %16 = sbr.rel (0) target = $region5
  $region4: #{gcn_forward.1} parent=0 // pred_region
    _
  $region5: #{gcn_forward.1} parent=0 // pred_fallthru
    _
  // Predicated region
  $region6: #{gcn_forward.1} parent=0 // pred_check
    _
  $region7: #{gcn_forward.1} parent=0 // pred_check_branch
    %18 = sbr.rel (0) target = $region9
  $region8: #{gcn_forward.1} parent=0 // pred_region
    _
  $region9: #{gcn_forward.1} parent=0 // pred_fallthru
    _
  // Predicated region
  $region10: #{gcn_forward.1} parent=0 // pred_check
    _
  $region11: #{gcn_forward.1} parent=0 // pred_check_branch
    %20 = sbr.rel (0) target = $region13
  $region12: #{gcn_forward.1} parent=0 // pred_region
    _
  $region13: #{gcn_forward.1} parent=0 // pred_fallthru
    _
  // Predicated region
  $region14: #{gcn_forward.1} parent=0 // pred_check
    _
  $region15: #{gcn_forward.1} parent=0 // pred_check_branch
    %22 = sbr.rel (0) target = $region17
  $region16: #{gcn_forward.1} parent=0 // pred_region
    _
  $region17: #{gcn_forward.1} parent=0 // pred_fallthru
    _
  // Predicated region
  $region18: #{gcn_forward.1} parent=0 // pred_check
    _
  $region19: #{gcn_forward.1} parent=0 // pred_check_branch
    %24 = sbr.rel (0) target = $region21
  $region20: #{gcn_forward.1} parent=0 // pred_region
    _
  $region21: #{gcn_forward.1} parent=0 // pred_fallthru
    _
  // Predicated region
  $region22: #{gcn_forward.1} parent=0 // pred_check
    _
  $region23: #{gcn_forward.1} parent=0 // pred_check_branch
    %26 = sbr.rel (0) target = $region25
  $region24: #{gcn_forward.1} parent=0 // pred_region
    _
  $region25: #{gcn_forward.1} parent=0 // pred_fallthru
    _
  // Predicated region
  $region26: #{gcn_forward.1} parent=0 // pred_check
    _
  $region27: #{gcn_forward.1} parent=0 // pred_check_branch
    %28 = sbr.rel (0) target = $region29
  $region28: #{gcn_forward.1} parent=0 // pred_region
    _
  $region29: #{gcn_forward.1} parent=0 // pred_fallthru
    _
  // Predicated region
  $region30: #{gcn_forward.1} parent=0 // pred_check
    _
  $region31: #{gcn_forward.1} parent=0 // pred_check_branch
    %30 = sbr.rel (0) target = $region33
  $region32: #{gcn_forward.1} parent=0 // pred_region
    _
  $region33: #{gcn_forward.1} parent=0 // pred_fallthru
    _
  // Predicated region
  $region34: #{gcn_forward.1} parent=0 // pred_check
    _
  $region35: #{gcn_forward.1} parent=0 // pred_check_branch
    %32 = sbr.rel (0) target = $region37
  $region36: #{gcn_forward.1} parent=0 // pred_region
    _
  $region37: #{gcn_forward.1} parent=0 // pred_fallthru
    _
  // Predicated region
  $region38: #{gcn_forward.1} parent=0 // pred_check
    _
  $region39: #{gcn_forward.1} parent=0 // pred_check_branch
    %34 = sbr.rel (0) target = $region41
  $region40: #{gcn_forward.1} parent=0 // pred_region
    _
  $region41: #{gcn_forward.1} parent=0 // pred_fallthru
    _
  %v35 = vld [vmem:[%s0] sm:$0xf]
  %v36 = vld [vmem:[%s0 + $0x4] sm:$0xf]
  %v37 = vld [vmem:[%s0 + $0x8] sm:$0xf]
  %v38 = vld [vmem:[%s0 + $0xc] sm:$0xf]
  %v39 = vld [vmem:[%s0 + $0x10] sm:$0xf]
  %v40 = vld [vmem:[%s0 + $0x14] sm:$0xf]
  %v41 = vld [vmem:[%s0 + $0x18] sm:$0xf]
  %v42 = vld [vmem:[%s0 + $0x1c] sm:$0xf]
  %v43 = vld [vmem:[%s0 + $0x20] sm:$0xf]
  %v44 = vld [vmem:[%s0 + $0x24] sm:$0xf]
  %v45 = vld [vmem:[%s0 + $0x28] sm:$0xf]
  %v46 = vld [vmem:[%s0 + $0x2c] sm:$0xf]
  %v47 = vld [vmem:[%s0 + $0x30] sm:$0xf]
  %v48 = vld [vmem:[%s0 + $0x34] sm:$0xf]
  %v49 = vld [vmem:[%s0 + $0x38] sm:$0xf]
  %v50 = vld [vmem:[%s0 + $0x3c] sm:$0xf]
  %v51 = vld [vmem:[%s1] sm:$0xf]
  %v52 = vld [vmem:[%s1 + $0x4] sm:$0xf]
  %v53 = vld [vmem:[%s1 + $0x8] sm:$0xf]
  %v54 = vld [vmem:[%s1 + $0xc] sm:$0xf]
  %v55 = vld [vmem:[%s1 + $0x10] sm:$0xf]
  %v56 = vld [vmem:[%s1 + $0x14] sm:$0xf]
  %v57 = vld [vmem:[%s1 + $0x18] sm:$0xf]
  %v58 = vld [vmem:[%s1 + $0x1c] sm:$0xf]
  %v59 = vld [vmem:[%s1 + $0x20] sm:$0xf]
  %v60 = vld [vmem:[%s1 + $0x24] sm:$0xf]
  %v61 = vld [vmem:[%s1 + $0x28] sm:$0xf]
  %v62 = vld [vmem:[%s1 + $0x2c] sm:$0xf]
  %v63 = vld [vmem:[%s1 + $0x30] sm:$0xf]
  %v64 = vld [vmem:[%s1 + $0x34] sm:$0xf]
  %v65 = vld [vmem:[%s1 + $0x38] sm:$0xf]
  %v66 = vld [vmem:[%s1 + $0x3c] sm:$0xf]
  %v83 = vunpack.c.l.b16 %v35
  %v84 = vunpack.c.l.b16 %v36
  %v85 = vunpack.c.l.b16 %v37
  %v86 = vunpack.c.l.b16 %v38
  %v87 = vunpack.c.l.b16 %v39
  %v88 = vunpack.c.l.b16 %v40
  %v89 = vunpack.c.l.b16 %v41
  %v90 = vunpack.c.l.b16 %v42
  %v91 = vunpack.c.l.b16 %v43
  %v92 = vunpack.c.l.b16 %v44
  %v93 = vunpack.c.l.b16 %v45
  %v94 = vunpack.c.l.b16 %v46
  %v95 = vunpack.c.l.b16 %v47
  %v96 = vunpack.c.l.b16 %v48
  %v97 = vunpack.c.l.b16 %v49
  %v98 = vunpack.c.l.b16 %v50
  %v99 = vpack.c.b16 %v84, %v83
  %v100 = vpack.c.b16 %v86, %v85
  %v101 = vpack.c.b16 %v88, %v87
  %v102 = vpack.c.b16 %v90, %v89
  %v103 = vpack.c.b16 %v92, %v91
  %v104 = vpack.c.b16 %v94, %v93
  %v105 = vpack.c.b16 %v96, %v95
  %v106 = vpack.c.b16 %v98, %v97
  %v131 = vunpack.c.l.b16 %v51
  %v132 = vunpack.c.l.b16 %v52
  %v133 = vunpack.c.l.b16 %v53
  %v134 = vunpack.c.l.b16 %v54
  %v135 = vunpack.c.l.b16 %v55
  %v136 = vunpack.c.l.b16 %v56
  %v137 = vunpack.c.l.b16 %v57
  %v138 = vunpack.c.l.b16 %v58
  %v139 = vunpack.c.l.b16 %v59
  %v140 = vunpack.c.l.b16 %v60
  %v141 = vunpack.c.l.b16 %v61
  %v142 = vunpack.c.l.b16 %v62
  %v143 = vunpack.c.l.b16 %v63
  %v144 = vunpack.c.l.b16 %v64
  %v145 = vunpack.c.l.b16 %v65
  %v146 = vunpack.c.l.b16 %v66
  %v147 = vpack.c.b16 %v132, %v131
  %v148 = vpack.c.b16 %v134, %v133
  %v149 = vpack.c.b16 %v136, %v135
  %v150 = vpack.c.b16 %v138, %v137
  %v151 = vpack.c.b16 %v140, %v139
  %v152 = vpack.c.b16 %v142, %v141
  %v153 = vpack.c.b16 %v144, %v143
  %v154 = vpack.c.b16 %v146, %v145
  %163 = vmatpush.bf16.msra.mxu0 %v154
  %164 = vmatpush.bf16.msra.mxu0 %v153
  %165 = vmatpush.bf16.msra.mxu0 %v152
  %166 = vmatpush.bf16.msra.mxu0 %v151
  %167 = vmatpush.bf16.msra.mxu0 %v150
  %168 = vmatpush.bf16.msra.mxu0 %v149
  %169 = vmatpush.bf16.msra.mxu0 %v148
  %170 = vmatpush.bf16.msra.mxu0 %v147
  %171 = vmatmul.bf16.gmra.mxu0 %v99
  %v172 = vpop.f32.mrf.mxu0
  %v173 = vadd.f32 0.0, %v172
  %v174 = vpop.f32.mrf.mxu0
  %v175 = vadd.f32 0.0, %v174
  %176 = vmatmul.bf16.gmra.mxu0 %v100
  %v177 = vpop.f32.mrf.mxu0
  %v178 = vadd.f32 0.0, %v177
  %v179 = vpop.f32.mrf.mxu0
  %v180 = vadd.f32 0.0, %v179
  %181 = vmatmul.bf16.gmra.mxu0 %v101
  %v182 = vpop.f32.mrf.mxu0
  %v183 = vadd.f32 0.0, %v182
  %v184 = vpop.f32.mrf.mxu0
  %v185 = vadd.f32 0.0, %v184
  %186 = vmatmul.bf16.gmra.mxu0 %v102
  %v187 = vpop.f32.mrf.mxu0
  %v188 = vadd.f32 0.0, %v187
  %v189 = vpop.f32.mrf.mxu0
  %v190 = vadd.f32 0.0, %v189
  %191 = vmatmul.bf16.gmra.mxu0 %v103
  %v192 = vpop.f32.mrf.mxu0
  %v193 = vadd.f32 0.0, %v192
  %v194 = vpop.f32.mrf.mxu0
  %v195 = vadd.f32 0.0, %v194
  %196 = vmatmul.bf16.gmra.mxu0 %v104
  %v197 = vpop.f32.mrf.mxu0
  %v198 = vadd.f32 0.0, %v197
  %v199 = vpop.f32.mrf.mxu0
  %v200 = vadd.f32 0.0, %v199
  %201 = vmatmul.bf16.gmra.mxu0 %v105
  %v202 = vpop.f32.mrf.mxu0
  %v203 = vadd.f32 0.0, %v202
  %v204 = vpop.f32.mrf.mxu0
  %v205 = vadd.f32 0.0, %v204
  %206 = vmatmul.bf16.gmra.mxu0 %v106
  %v207 = vpop.f32.mrf.mxu0
  %v208 = vadd.f32 0.0, %v207
  %v209 = vpop.f32.mrf.mxu0
  %v210 = vadd.f32 0.0, %v209
  %211 = vdwg.mxu0
  %v212 = vpack.c.bf16 %v175, %v173
  %v213 = vpack.c.bf16 %v180, %v178
  %v214 = vpack.c.bf16 %v185, %v183
  %v215 = vpack.c.bf16 %v190, %v188
  %v216 = vpack.c.bf16 %v195, %v193
  %v217 = vpack.c.bf16 %v200, %v198
  %v218 = vpack.c.bf16 %v205, %v203
  %v219 = vpack.c.bf16 %v210, %v208
  %v220 = vld [vmem:[%s2] sm:$0xff]
  %v221 = vld [vmem:[%s2 + $0x8] sm:$0xff]
  %v222 = vld [vmem:[%s2 + $0x10] sm:$0xff]
  %v223 = vld [vmem:[%s2 + $0x18] sm:$0xff]
  %v224 = vld [vmem:[%s2 + $0x20] sm:$0xff]
  %v225 = vld [vmem:[%s2 + $0x28] sm:$0xff]
  %v226 = vld [vmem:[%s2 + $0x30] sm:$0xff]
  %v227 = vld [vmem:[%s2 + $0x38] sm:$0xff]
  %v228 = vld [vmem:[%s2 + $0x40] sm:$0xff]
  %v229 = vld [vmem:[%s2 + $0x48] sm:$0xff]
  %v230 = vld [vmem:[%s2 + $0x50] sm:$0xff]
  %v231 = vld [vmem:[%s2 + $0x58] sm:$0xff]
  %v232 = vld [vmem:[%s2 + $0x60] sm:$0xff]
  %v233 = vld [vmem:[%s2 + $0x68] sm:$0xff]
  %v234 = vld [vmem:[%s2 + $0x70] sm:$0xff]
  %v235 = vld [vmem:[%s2 + $0x78] sm:$0xff]
  %v236 = vld [vmem:[%s3] sm:$0x3]
  %v238 = vperm.slane %v236, 0
  %v239 = vperm.slane %v236, 1
  %v258 = vunpack.c.l.b16 %v220
  %v259 = vunpack.c.h.b16 %v220
  %v260 = vunpack.c.l.b16 %v221
  %v261 = vunpack.c.h.b16 %v221
  %v262 = vunpack.c.l.b16 %v222
  %v263 = vunpack.c.h.b16 %v222
  %v264 = vunpack.c.l.b16 %v223
  %v265 = vunpack.c.h.b16 %v223
  %v266 = vunpack.c.l.b16 %v224
  %v267 = vunpack.c.h.b16 %v224
  %v268 = vunpack.c.l.b16 %v225
  %v269 = vunpack.c.h.b16 %v225
  %v270 = vunpack.c.l.b16 %v226
  %v271 = vunpack.c.h.b16 %v226
  %v272 = vunpack.c.l.b16 %v227
  %v273 = vunpack.c.h.b16 %v227
  %v274 = vunpack.c.l.b16 %v228
  %v275 = vunpack.c.h.b16 %v228
  %v276 = vunpack.c.l.b16 %v229
  %v277 = vunpack.c.h.b16 %v229
  %v278 = vunpack.c.l.b16 %v230
  %v279 = vunpack.c.h.b16 %v230
  %v280 = vunpack.c.l.b16 %v231
  %v281 = vunpack.c.h.b16 %v231
  %v282 = vunpack.c.l.b16 %v232
  %v283 = vunpack.c.h.b16 %v232
  %v284 = vunpack.c.l.b16 %v233
  %v285 = vunpack.c.h.b16 %v233
  %v286 = vunpack.c.l.b16 %v234
  %v287 = vunpack.c.h.b16 %v234
  %v288 = vunpack.c.l.b16 %v235
  %v289 = vunpack.c.h.b16 %v235
  %v290 = vpack.c.b16 %v260, %v258
  %v291 = vpack.c.b16 %v261, %v259
  %v292 = vpack.c.b16 %v264, %v262
  %v293 = vpack.c.b16 %v265, %v263
  %v294 = vpack.c.b16 %v268, %v266
  %v295 = vpack.c.b16 %v269, %v267
  %v296 = vpack.c.b16 %v272, %v270
  %v297 = vpack.c.b16 %v273, %v271
  %v298 = vpack.c.b16 %v276, %v274
  %v299 = vpack.c.b16 %v277, %v275
  %v300 = vpack.c.b16 %v280, %v278
  %v301 = vpack.c.b16 %v281, %v279
  %v302 = vpack.c.b16 %v284, %v282
  %v303 = vpack.c.b16 %v285, %v283
  %v304 = vpack.c.b16 %v288, %v286
  %v305 = vpack.c.b16 %v289, %v287
  %322 = vmatpush.bf16.msra.mxu0 %v304
  %323 = vmatpush.bf16.msra.mxu0 %v302
  %324 = vmatpush.bf16.msra.mxu0 %v300
  %325 = vmatpush.bf16.msra.mxu0 %v298
  %326 = vmatpush.bf16.msra.mxu0 %v296
  %327 = vmatpush.bf16.msra.mxu0 %v294
  %328 = vmatpush.bf16.msra.mxu0 %v292
  %329 = vmatpush.bf16.msra.mxu0 %v290
  %330 = vmatmul.bf16.gmra.mxu0 %v212
  %v331 = vpop.f32.mrf.mxu0
  %v332 = vadd.f32 %v238, %v331
  %v333 = vpop.f32.mrf.mxu0
  %v334 = vadd.f32 %v238, %v333
  %335 = vmatmul.bf16.gmra.mxu0 %v213
  %v336 = vpop.f32.mrf.mxu0
  %v337 = vadd.f32 %v238, %v336
  %v338 = vpop.f32.mrf.mxu0
  %v339 = vadd.f32 %v238, %v338
  %340 = vmatmul.bf16.gmra.mxu0 %v214
  %v341 = vpop.f32.mrf.mxu0
  %v342 = vadd.f32 %v238, %v341
  %v343 = vpop.f32.mrf.mxu0
  %v344 = vadd.f32 %v238, %v343
  %345 = vmatmul.bf16.gmra.mxu0 %v215
  %v346 = vpop.f32.mrf.mxu0
  %v347 = vadd.f32 %v238, %v346
  %v348 = vpop.f32.mrf.mxu0
  %v349 = vadd.f32 %v238, %v348
  %350 = vmatmul.bf16.gmra.mxu0 %v216
  %v351 = vpop.f32.mrf.mxu0
  %v352 = vadd.f32 %v238, %v351
  %v353 = vpop.f32.mrf.mxu0
  %v354 = vadd.f32 %v238, %v353
  %355 = vmatmul.bf16.gmra.mxu0 %v217
  %v356 = vpop.f32.mrf.mxu0
  %v357 = vadd.f32 %v238, %v356
  %v358 = vpop.f32.mrf.mxu0
  %v359 = vadd.f32 %v238, %v358
  %360 = vmatmul.bf16.gmra.mxu0 %v218
  %v361 = vpop.f32.mrf.mxu0
  %v362 = vadd.f32 %v238, %v361
  %v363 = vpop.f32.mrf.mxu0
  %v364 = vadd.f32 %v238, %v363
  %365 = vmatmul.bf16.gmra.mxu0 %v219
  %v366 = vpop.f32.mrf.mxu0
  %v367 = vadd.f32 %v238, %v366
  %v368 = vpop.f32.mrf.mxu0
  %v369 = vadd.f32 %v238, %v368
  %370 = vdwg.mxu0
  %371 = vmatpush.bf16.msra.mxu0 %v305
  %372 = vmatpush.bf16.msra.mxu0 %v303
  %373 = vmatpush.bf16.msra.mxu0 %v301
  %374 = vmatpush.bf16.msra.mxu0 %v299
  %375 = vmatpush.bf16.msra.mxu0 %v297
  %376 = vmatpush.bf16.msra.mxu0 %v295
  %377 = vmatpush.bf16.msra.mxu0 %v293
  %378 = vmatpush.bf16.msra.mxu0 %v291
  %379 = vmatmul.bf16.gmra.mxu0 %v212
  %v380 = vpop.f32.mrf.mxu0
  %v381 = vadd.f32 %v239, %v380
  %v382 = vpop.f32.mrf.mxu0
  %v383 = vadd.f32 %v239, %v382
  %384 = vmatmul.bf16.gmra.mxu0 %v213
  %v385 = vpop.f32.mrf.mxu0
  %v386 = vadd.f32 %v239, %v385
  %v387 = vpop.f32.mrf.mxu0
  %v388 = vadd.f32 %v239, %v387
  %389 = vmatmul.bf16.gmra.mxu0 %v214
  %v390 = vpop.f32.mrf.mxu0
  %v391 = vadd.f32 %v239, %v390
  %v392 = vpop.f32.mrf.mxu0
  %v393 = vadd.f32 %v239, %v392
  %394 = vmatmul.bf16.gmra.mxu0 %v215
  %v395 = vpop.f32.mrf.mxu0
  %v396 = vadd.f32 %v239, %v395
  %v397 = vpop.f32.mrf.mxu0
  %v398 = vadd.f32 %v239, %v397
  %399 = vmatmul.bf16.gmra.mxu0 %v216
  %v400 = vpop.f32.mrf.mxu0
  %v401 = vadd.f32 %v239, %v400
  %v402 = vpop.f32.mrf.mxu0
  %v403 = vadd.f32 %v239, %v402
  %404 = vmatmul.bf16.gmra.mxu0 %v217
  %v405 = vpop.f32.mrf.mxu0
  %v406 = vadd.f32 %v239, %v405
  %v407 = vpop.f32.mrf.mxu0
  %v408 = vadd.f32 %v239, %v407
  %409 = vmatmul.bf16.gmra.mxu0 %v218
  %v410 = vpop.f32.mrf.mxu0
  %v411 = vadd.f32 %v239, %v410
  %v412 = vpop.f32.mrf.mxu0
  %v413 = vadd.f32 %v239, %v412
  %414 = vmatmul.bf16.gmra.mxu0 %v219
  %v415 = vpop.f32.mrf.mxu0
  %v416 = vadd.f32 %v239, %v415
  %v417 = vpop.f32.mrf.mxu0
  %v418 = vadd.f32 %v239, %v417
  %419 = vdwg.mxu0
  %v420 = vmax.f32 %v332, 0.0
  %v421 = vmax.f32 %v381, 0.0
  %v422 = vmax.f32 %v334, 0.0
  %v423 = vmax.f32 %v383, 0.0
  %v424 = vmax.f32 %v337, 0.0
  %v425 = vmax.f32 %v386, 0.0
  %v426 = vmax.f32 %v339, 0.0
  %v427 = vmax.f32 %v388, 0.0
  %v428 = vmax.f32 %v342, 0.0
  %v429 = vmax.f32 %v391, 0.0
  %v430 = vmax.f32 %v344, 0.0
  %v431 = vmax.f32 %v393, 0.0
  %v432 = vmax.f32 %v347, 0.0
  %v433 = vmax.f32 %v396, 0.0
  %v434 = vmax.f32 %v349, 0.0
  %v435 = vmax.f32 %v398, 0.0
  %v436 = vmax.f32 %v352, 0.0
  %v437 = vmax.f32 %v401, 0.0
  %v438 = vmax.f32 %v354, 0.0
  %v439 = vmax.f32 %v403, 0.0
  %v440 = vmax.f32 %v357, 0.0
  %v441 = vmax.f32 %v406, 0.0
  %v442 = vmax.f32 %v359, 0.0
  %v443 = vmax.f32 %v408, 0.0
  %v444 = vmax.f32 %v362, 0.0
  %v445 = vmax.f32 %v411, 0.0
  %v446 = vmax.f32 %v364, 0.0
  %v447 = vmax.f32 %v413, 0.0
  %v448 = vmax.f32 %v367, 0.0
  %v449 = vmax.f32 %v416, 0.0
  %v450 = vmax.f32 %v369, 0.0
  %v451 = vmax.f32 %v418, 0.0
  %v452 = vpack.c.bf16 %v422, %v420
  %v453 = vpack.c.bf16 %v423, %v421
  %v454 = vpack.c.bf16 %v426, %v424
  %v455 = vpack.c.bf16 %v427, %v425
  %v456 = vpack.c.bf16 %v430, %v428
  %v457 = vpack.c.bf16 %v431, %v429
  %v458 = vpack.c.bf16 %v434, %v432
  %v459 = vpack.c.bf16 %v435, %v433
  %v460 = vpack.c.bf16 %v438, %v436
  %v461 = vpack.c.bf16 %v439, %v437
  %v462 = vpack.c.bf16 %v442, %v440
  %v463 = vpack.c.bf16 %v443, %v441
  %v464 = vpack.c.bf16 %v446, %v444
  %v465 = vpack.c.bf16 %v447, %v445
  %v466 = vpack.c.bf16 %v450, %v448
  %v467 = vpack.c.bf16 %v451, %v449
  %v468 = vld [vmem:[%s4] sm:$0xf]
  %v469 = vld [vmem:[%s4 + $0x4] sm:$0xf]
  %v470 = vld [vmem:[%s4 + $0x8] sm:$0xf]
  %v471 = vld [vmem:[%s4 + $0xc] sm:$0xf]
  %v472 = vld [vmem:[%s4 + $0x10] sm:$0xf]
  %v473 = vld [vmem:[%s4 + $0x14] sm:$0xf]
  %v474 = vld [vmem:[%s4 + $0x18] sm:$0xf]
  %v475 = vld [vmem:[%s4 + $0x1c] sm:$0xf]
  %v476 = vld [vmem:[%s4 + $0x20] sm:$0xf]
  %v477 = vld [vmem:[%s4 + $0x24] sm:$0xf]
  %v478 = vld [vmem:[%s4 + $0x28] sm:$0xf]
  %v479 = vld [vmem:[%s4 + $0x2c] sm:$0xf]
  %v480 = vld [vmem:[%s4 + $0x30] sm:$0xf]
  %v481 = vld [vmem:[%s4 + $0x34] sm:$0xf]
  %v482 = vld [vmem:[%s4 + $0x38] sm:$0xf]
  %v483 = vld [vmem:[%s4 + $0x3c] sm:$0xf]
  %v484 = vld [vmem:[%s4 + $0x40] sm:$0xf]
  %v485 = vld [vmem:[%s4 + $0x44] sm:$0xf]
  %v486 = vld [vmem:[%s4 + $0x48] sm:$0xf]
  %v487 = vld [vmem:[%s4 + $0x4c] sm:$0xf]
  %v488 = vld [vmem:[%s4 + $0x50] sm:$0xf]
  %v489 = vld [vmem:[%s4 + $0x54] sm:$0xf]
  %v490 = vld [vmem:[%s4 + $0x58] sm:$0xf]
  %v491 = vld [vmem:[%s4 + $0x5c] sm:$0xf]
  %v492 = vld [vmem:[%s4 + $0x60] sm:$0xf]
  %v493 = vld [vmem:[%s4 + $0x64] sm:$0xf]
  %v494 = vld [vmem:[%s4 + $0x68] sm:$0xf]
  %v495 = vld [vmem:[%s4 + $0x6c] sm:$0xf]
  %v496 = vld [vmem:[%s4 + $0x70] sm:$0xf]
  %v497 = vld [vmem:[%s4 + $0x74] sm:$0xf]
  %v498 = vld [vmem:[%s4 + $0x78] sm:$0xf]
  %v499 = vld [vmem:[%s4 + $0x7c] sm:$0xf]
  %v532 = vunpack.c.l.b16 %v468
  %v533 = vunpack.c.l.b16 %v469
  %v534 = vunpack.c.l.b16 %v470
  %v535 = vunpack.c.l.b16 %v471
  %v536 = vunpack.c.l.b16 %v472
  %v537 = vunpack.c.l.b16 %v473
  %v538 = vunpack.c.l.b16 %v474
  %v539 = vunpack.c.l.b16 %v475
  %v540 = vunpack.c.l.b16 %v476
  %v541 = vunpack.c.l.b16 %v477
  %v542 = vunpack.c.l.b16 %v478
  %v543 = vunpack.c.l.b16 %v479
  %v544 = vunpack.c.l.b16 %v480
  %v545 = vunpack.c.l.b16 %v481
  %v546 = vunpack.c.l.b16 %v482
  %v547 = vunpack.c.l.b16 %v483
  %v548 = vunpack.c.l.b16 %v484
  %v549 = vunpack.c.l.b16 %v485
  %v550 = vunpack.c.l.b16 %v486
  %v551 = vunpack.c.l.b16 %v487
  %v552 = vunpack.c.l.b16 %v488
  %v553 = vunpack.c.l.b16 %v489
  %v554 = vunpack.c.l.b16 %v490
  %v555 = vunpack.c.l.b16 %v491
  %v556 = vunpack.c.l.b16 %v492
  %v557 = vunpack.c.l.b16 %v493
  %v558 = vunpack.c.l.b16 %v494
  %v559 = vunpack.c.l.b16 %v495
  %v560 = vunpack.c.l.b16 %v496
  %v561 = vunpack.c.l.b16 %v497
  %v562 = vunpack.c.l.b16 %v498
  %v563 = vunpack.c.l.b16 %v499
  %v564 = vpack.c.b16 %v533, %v532
  %v565 = vpack.c.b16 %v535, %v534
  %v566 = vpack.c.b16 %v537, %v536
  %v567 = vpack.c.b16 %v539, %v538
  %v568 = vpack.c.b16 %v541, %v540
  %v569 = vpack.c.b16 %v543, %v542
  %v570 = vpack.c.b16 %v545, %v544
  %v571 = vpack.c.b16 %v547, %v546
  %v572 = vpack.c.b16 %v549, %v548
  %v573 = vpack.c.b16 %v551, %v550
  %v574 = vpack.c.b16 %v553, %v552
  %v575 = vpack.c.b16 %v555, %v554
  %v576 = vpack.c.b16 %v557, %v556
  %v577 = vpack.c.b16 %v559, %v558
  %v578 = vpack.c.b16 %v561, %v560
  %v579 = vpack.c.b16 %v563, %v562
  %596 = vmatpush.bf16.msra.mxu0 %v571
  %597 = vmatpush.bf16.msra.mxu0 %v570
  %598 = vmatpush.bf16.msra.mxu0 %v569
  %599 = vmatpush.bf16.msra.mxu0 %v568
  %600 = vmatpush.bf16.msra.mxu0 %v567
  %601 = vmatpush.bf16.msra.mxu0 %v566
  %602 = vmatpush.bf16.msra.mxu0 %v565
  %603 = vmatpush.bf16.msra.mxu0 %v564
  %604 = vmatmul.bf16.gmra.mxu0 %v452
  %v605 = vpop.f32.mrf.mxu0
  %v606 = vadd.f32 0.0, %v605
  %v607 = vpop.f32.mrf.mxu0
  %v608 = vadd.f32 0.0, %v607
  %609 = vmatmul.bf16.gmra.mxu0 %v454
  %v610 = vpop.f32.mrf.mxu0
  %v611 = vadd.f32 0.0, %v610
  %v612 = vpop.f32.mrf.mxu0
  %v613 = vadd.f32 0.0, %v612
  %614 = vmatmul.bf16.gmra.mxu0 %v456
  %v615 = vpop.f32.mrf.mxu0
  %v616 = vadd.f32 0.0, %v615
  %v617 = vpop.f32.mrf.mxu0
  %v618 = vadd.f32 0.0, %v617
  %619 = vmatmul.bf16.gmra.mxu0 %v458
  %v620 = vpop.f32.mrf.mxu0
  %v621 = vadd.f32 0.0, %v620
  %v622 = vpop.f32.mrf.mxu0
  %v623 = vadd.f32 0.0, %v622
  %624 = vmatmul.bf16.gmra.mxu0 %v460
  %v625 = vpop.f32.mrf.mxu0
  %v626 = vadd.f32 0.0, %v625
  %v627 = vpop.f32.mrf.mxu0
  %v628 = vadd.f32 0.0, %v627
  %629 = vmatmul.bf16.gmra.mxu0 %v462
  %v630 = vpop.f32.mrf.mxu0
  %v631 = vadd.f32 0.0, %v630
  %v632 = vpop.f32.mrf.mxu0
  %v633 = vadd.f32 0.0, %v632
  %634 = vmatmul.bf16.gmra.mxu0 %v464
  %v635 = vpop.f32.mrf.mxu0
  %v636 = vadd.f32 0.0, %v635
  %v637 = vpop.f32.mrf.mxu0
  %v638 = vadd.f32 0.0, %v637
  %639 = vmatmul.bf16.gmra.mxu0 %v466
  %v640 = vpop.f32.mrf.mxu0
  %v641 = vadd.f32 0.0, %v640
  %v642 = vpop.f32.mrf.mxu0
  %v643 = vadd.f32 0.0, %v642
  %644 = vdwg.mxu0
  %645 = vmatpush.bf16.msra.mxu0 %v579
  %646 = vmatpush.bf16.msra.mxu0 %v578
  %647 = vmatpush.bf16.msra.mxu0 %v577
  %648 = vmatpush.bf16.msra.mxu0 %v576
  %649 = vmatpush.bf16.msra.mxu0 %v575
  %650 = vmatpush.bf16.msra.mxu0 %v574
  %651 = vmatpush.bf16.msra.mxu0 %v573
  %652 = vmatpush.bf16.msra.mxu0 %v572
  %653 = vmatmul.bf16.gmra.mxu0 %v453
  %v654 = vpop.f32.mrf.mxu0
  %v655 = vadd.f32 %v606, %v654
  %v656 = vpop.f32.mrf.mxu0
  %v657 = vadd.f32 %v608, %v656
  %658 = vmatmul.bf16.gmra.mxu0 %v455
  %v659 = vpop.f32.mrf.mxu0
  %v660 = vadd.f32 %v611, %v659
  %v661 = vpop.f32.mrf.mxu0
  %v662 = vadd.f32 %v613, %v661
  %663 = vmatmul.bf16.gmra.mxu0 %v457
  %v664 = vpop.f32.mrf.mxu0
  %v665 = vadd.f32 %v616, %v664
  %v666 = vpop.f32.mrf.mxu0
  %v667 = vadd.f32 %v618, %v666
  %668 = vmatmul.bf16.gmra.mxu0 %v459
  %v669 = vpop.f32.mrf.mxu0
  %v670 = vadd.f32 %v621, %v669
  %v671 = vpop.f32.mrf.mxu0
  %v672 = vadd.f32 %v623, %v671
  %673 = vmatmul.bf16.gmra.mxu0 %v461
  %v674 = vpop.f32.mrf.mxu0
  %v675 = vadd.f32 %v626, %v674
  %v676 = vpop.f32.mrf.mxu0
  %v677 = vadd.f32 %v628, %v676
  %678 = vmatmul.bf16.gmra.mxu0 %v463
  %v679 = vpop.f32.mrf.mxu0
  %v680 = vadd.f32 %v631, %v679
  %v681 = vpop.f32.mrf.mxu0
  %v682 = vadd.f32 %v633, %v681
  %683 = vmatmul.bf16.gmra.mxu0 %v465
  %v684 = vpop.f32.mrf.mxu0
  %v685 = vadd.f32 %v636, %v684
  %v686 = vpop.f32.mrf.mxu0
  %v687 = vadd.f32 %v638, %v686
  %688 = vmatmul.bf16.gmra.mxu0 %v467
  %v689 = vpop.f32.mrf.mxu0
  %v690 = vadd.f32 %v641, %v689
  %v691 = vpop.f32.mrf.mxu0
  %v692 = vadd.f32 %v643, %v691
  %693 = vdwg.mxu0
  %v694 = vpack.c.bf16 %v657, %v655
  %v695 = vpack.c.bf16 %v662, %v660
  %v696 = vpack.c.bf16 %v667, %v665
  %v697 = vpack.c.bf16 %v672, %v670
  %v698 = vpack.c.bf16 %v677, %v675
  %v699 = vpack.c.bf16 %v682, %v680
  %v700 = vpack.c.bf16 %v687, %v685
  %v701 = vpack.c.bf16 %v692, %v690
  %v702 = vld [vmem:[%s5] sm:$0x1]
  %v704 = vperm.slane %v702, 0
  %706 = vmatpush.bf16.msra.mxu0 %v701
  %707 = vmatpush.bf16.msra.mxu0 %v700
  %708 = vmatpush.bf16.msra.mxu0 %v699
  %709 = vmatpush.bf16.msra.mxu0 %v698
  %710 = vmatpush.bf16.msra.mxu0 %v697
  %711 = vmatpush.bf16.msra.mxu0 %v696
  %712 = vmatpush.bf16.msra.mxu0 %v695
  %713 = vmatpush.bf16.msra.mxu0 %v694
  %714 = vmatmul.bf16.gmra.mxu0 %v99
  %v715 = vpop.f32.mrf.mxu0
  %v716 = vadd.f32 %v704, %v715
  %v717 = vpop.f32.mrf.mxu0
  %v718 = vadd.f32 %v704, %v717
  %719 = vmatmul.bf16.gmra.mxu0 %v100
  %v720 = vpop.f32.mrf.mxu0
  %v721 = vadd.f32 %v704, %v720
  %v722 = vpop.f32.mrf.mxu0
  %v723 = vadd.f32 %v704, %v722
  %724 = vmatmul.bf16.gmra.mxu0 %v101
  %v725 = vpop.f32.mrf.mxu0
  %v726 = vadd.f32 %v704, %v725
  %v727 = vpop.f32.mrf.mxu0
  %v728 = vadd.f32 %v704, %v727
  %729 = vmatmul.bf16.gmra.mxu0 %v102
  %v730 = vpop.f32.mrf.mxu0
  %v731 = vadd.f32 %v704, %v730
  %v732 = vpop.f32.mrf.mxu0
  %v733 = vadd.f32 %v704, %v732
  %734 = vmatmul.bf16.gmra.mxu0 %v103
  %v735 = vpop.f32.mrf.mxu0
  %v736 = vadd.f32 %v704, %v735
  %v737 = vpop.f32.mrf.mxu0
  %v738 = vadd.f32 %v704, %v737
  %739 = vmatmul.bf16.gmra.mxu0 %v104
  %v740 = vpop.f32.mrf.mxu0
  %v741 = vadd.f32 %v704, %v740
  %v742 = vpop.f32.mrf.mxu0
  %v743 = vadd.f32 %v704, %v742
  %744 = vmatmul.bf16.gmra.mxu0 %v105
  %v745 = vpop.f32.mrf.mxu0
  %v746 = vadd.f32 %v704, %v745
  %v747 = vpop.f32.mrf.mxu0
  %v748 = vadd.f32 %v704, %v747
  %749 = vmatmul.bf16.gmra.mxu0 %v106
  %v750 = vpop.f32.mrf.mxu0
  %v751 = vadd.f32 %v704, %v750
  %v752 = vpop.f32.mrf.mxu0
  %v753 = vadd.f32 %v704, %v752
  %754 = vdwg.mxu0
  %v755 = vmax.f32 %v716, 0.0
  %v756 = vmax.f32 %v718, 0.0
  %v757 = vmax.f32 %v721, 0.0
  %v758 = vmax.f32 %v723, 0.0
  %v759 = vmax.f32 %v726, 0.0
  %v760 = vmax.f32 %v728, 0.0
  %v761 = vmax.f32 %v731, 0.0
  %v762 = vmax.f32 %v733, 0.0
  %v763 = vmax.f32 %v736, 0.0
  %v764 = vmax.f32 %v738, 0.0
  %v765 = vmax.f32 %v741, 0.0
  %v766 = vmax.f32 %v743, 0.0
  %v767 = vmax.f32 %v746, 0.0
  %v768 = vmax.f32 %v748, 0.0
  %v769 = vmax.f32 %v751, 0.0
  %v770 = vmax.f32 %v753, 0.0
  %v771 = vpack.c.bf16 %v756, %v755
  %v772 = vpack.c.bf16 %v758, %v757
  %v773 = vpack.c.bf16 %v760, %v759
  %v774 = vpack.c.bf16 %v762, %v761
  %v775 = vpack.c.bf16 %v764, %v763
  %v776 = vpack.c.bf16 %v766, %v765
  %v777 = vpack.c.bf16 %v768, %v767
  %v778 = vpack.c.bf16 %v770, %v769
  %v779 = vld [vmem:[%s6] sm:$0xf]
  %v780 = vld [vmem:[%s6 + $0x4] sm:$0xf]
  %v781 = vld [vmem:[%s6 + $0x8] sm:$0xf]
  %v782 = vld [vmem:[%s6 + $0xc] sm:$0xf]
  %v783 = vld [vmem:[%s6 + $0x10] sm:$0xf]
  %v784 = vld [vmem:[%s6 + $0x14] sm:$0xf]
  %v785 = vld [vmem:[%s6 + $0x18] sm:$0xf]
  %v786 = vld [vmem:[%s6 + $0x1c] sm:$0xf]
  %v787 = vld [vmem:[%s6 + $0x20] sm:$0xf]
  %v788 = vld [vmem:[%s6 + $0x24] sm:$0xf]
  %v789 = vld [vmem:[%s6 + $0x28] sm:$0xf]
  %v790 = vld [vmem:[%s6 + $0x2c] sm:$0xf]
  %v791 = vld [vmem:[%s6 + $0x30] sm:$0xf]
  %v792 = vld [vmem:[%s6 + $0x34] sm:$0xf]
  %v793 = vld [vmem:[%s6 + $0x38] sm:$0xf]
  %v794 = vld [vmem:[%s6 + $0x3c] sm:$0xf]
  %v811 = vunpack.c.l.b16 %v779
  %v812 = vunpack.c.l.b16 %v780
  %v813 = vunpack.c.l.b16 %v781
  %v814 = vunpack.c.l.b16 %v782
  %v815 = vunpack.c.l.b16 %v783
  %v816 = vunpack.c.l.b16 %v784
  %v817 = vunpack.c.l.b16 %v785
  %v818 = vunpack.c.l.b16 %v786
  %v819 = vunpack.c.l.b16 %v787
  %v820 = vunpack.c.l.b16 %v788
  %v821 = vunpack.c.l.b16 %v789
  %v822 = vunpack.c.l.b16 %v790
  %v823 = vunpack.c.l.b16 %v791
  %v824 = vunpack.c.l.b16 %v792
  %v825 = vunpack.c.l.b16 %v793
  %v826 = vunpack.c.l.b16 %v794
  %v827 = vpack.c.b16 %v812, %v811
  %v828 = vpack.c.b16 %v814, %v813
  %v829 = vpack.c.b16 %v816, %v815
  %v830 = vpack.c.b16 %v818, %v817
  %v831 = vpack.c.b16 %v820, %v819
  %v832 = vpack.c.b16 %v822, %v821
  %v833 = vpack.c.b16 %v824, %v823
  %v834 = vpack.c.b16 %v826, %v825
  %843 = vmatpush.bf16.msra.mxu0 %v834
  %844 = vmatpush.bf16.msra.mxu0 %v833
  %845 = vmatpush.bf16.msra.mxu0 %v832
  %846 = vmatpush.bf16.msra.mxu0 %v831
  %847 = vmatpush.bf16.msra.mxu0 %v830
  %848 = vmatpush.bf16.msra.mxu0 %v829
  %849 = vmatpush.bf16.msra.mxu0 %v828
  %850 = vmatpush.bf16.msra.mxu0 %v827
  %851 = vmatmul.bf16.gmra.mxu0 %v771
  %v852 = vpop.f32.mrf.mxu0
  %v853 = vadd.f32 0.0, %v852
  %v854 = vpop.f32.mrf.mxu0
  %v855 = vadd.f32 0.0, %v854
  %856 = vmatmul.bf16.gmra.mxu0 %v772
  %v857 = vpop.f32.mrf.mxu0
  %v858 = vadd.f32 0.0, %v857
  %v859 = vpop.f32.mrf.mxu0
  %v860 = vadd.f32 0.0, %v859
  %861 = vmatmul.bf16.gmra.mxu0 %v773
  %v862 = vpop.f32.mrf.mxu0
  %v863 = vadd.f32 0.0, %v862
  %v864 = vpop.f32.mrf.mxu0
  %v865 = vadd.f32 0.0, %v864
  %866 = vmatmul.bf16.gmra.mxu0 %v774
  %v867 = vpop.f32.mrf.mxu0
  %v868 = vadd.f32 0.0, %v867
  %v869 = vpop.f32.mrf.mxu0
  %v870 = vadd.f32 0.0, %v869
  %871 = vmatmul.bf16.gmra.mxu0 %v775
  %v872 = vpop.f32.mrf.mxu0
  %v873 = vadd.f32 0.0, %v872
  %v874 = vpop.f32.mrf.mxu0
  %v875 = vadd.f32 0.0, %v874
  %876 = vmatmul.bf16.gmra.mxu0 %v776
  %v877 = vpop.f32.mrf.mxu0
  %v878 = vadd.f32 0.0, %v877
  %v879 = vpop.f32.mrf.mxu0
  %v880 = vadd.f32 0.0, %v879
  %881 = vmatmul.bf16.gmra.mxu0 %v777
  %v882 = vpop.f32.mrf.mxu0
  %v883 = vadd.f32 0.0, %v882
  %v884 = vpop.f32.mrf.mxu0
  %v885 = vadd.f32 0.0, %v884
  %886 = vmatmul.bf16.gmra.mxu0 %v778
  %v887 = vpop.f32.mrf.mxu0
  %v888 = vadd.f32 0.0, %v887
  %v889 = vpop.f32.mrf.mxu0
  %v890 = vadd.f32 0.0, %v889
  %891 = vdwg.mxu0
  %v892 = vpack.c.bf16 %v855, %v853
  %v893 = vpack.c.bf16 %v860, %v858
  %v894 = vpack.c.bf16 %v865, %v863
  %v895 = vpack.c.bf16 %v870, %v868
  %v896 = vpack.c.bf16 %v875, %v873
  %v897 = vpack.c.bf16 %v880, %v878
  %v898 = vpack.c.bf16 %v885, %v883
  %v899 = vpack.c.bf16 %v890, %v888
  %v900 = vld [vmem:[%s7] sm:$0x1]
  %v902 = vperm.slane %v900, 0
  %904 = vmatpush.bf16.msra.mxu0 %v899
  %905 = vmatpush.bf16.msra.mxu0 %v898
  %906 = vmatpush.bf16.msra.mxu0 %v897
  %907 = vmatpush.bf16.msra.mxu0 %v896
  %908 = vmatpush.bf16.msra.mxu0 %v895
  %909 = vmatpush.bf16.msra.mxu0 %v894
  %910 = vmatpush.bf16.msra.mxu0 %v893
  %911 = vmatpush.bf16.msra.mxu0 %v892
  %912 = vmatmul.bf16.gmra.mxu0 %v99
  %v913 = vpop.f32.mrf.mxu0
  %v914 = vadd.f32 %v902, %v913
  %v915 = vpop.f32.mrf.mxu0
  %v916 = vadd.f32 %v902, %v915
  %917 = vmatmul.bf16.gmra.mxu0 %v100
  %v918 = vpop.f32.mrf.mxu0
  %v919 = vadd.f32 %v902, %v918
  %v920 = vpop.f32.mrf.mxu0
  %v921 = vadd.f32 %v902, %v920
  %922 = vmatmul.bf16.gmra.mxu0 %v101
  %v923 = vpop.f32.mrf.mxu0
  %v924 = vadd.f32 %v902, %v923
  %v925 = vpop.f32.mrf.mxu0
  %v926 = vadd.f32 %v902, %v925
  %927 = vmatmul.bf16.gmra.mxu0 %v102
  %v928 = vpop.f32.mrf.mxu0
  %v929 = vadd.f32 %v902, %v928
  %v930 = vpop.f32.mrf.mxu0
  %v931 = vadd.f32 %v902, %v930
  %932 = vmatmul.bf16.gmra.mxu0 %v103
  %v933 = vpop.f32.mrf.mxu0
  %v934 = vadd.f32 %v902, %v933
  %v935 = vpop.f32.mrf.mxu0
  %v936 = vadd.f32 %v902, %v935
  %937 = vmatmul.bf16.gmra.mxu0 %v104
  %v938 = vpop.f32.mrf.mxu0
  %v939 = vadd.f32 %v902, %v938
  %v940 = vpop.f32.mrf.mxu0
  %v941 = vadd.f32 %v902, %v940
  %942 = vmatmul.bf16.gmra.mxu0 %v105
  %v943 = vpop.f32.mrf.mxu0
  %v944 = vadd.f32 %v902, %v943
  %v945 = vpop.f32.mrf.mxu0
  %v946 = vadd.f32 %v902, %v945
  %947 = vmatmul.bf16.gmra.mxu0 %v106
  %v948 = vpop.f32.mrf.mxu0
  %v949 = vadd.f32 %v902, %v948
  %v950 = vpop.f32.mrf.mxu0
  %v951 = vadd.f32 %v902, %v950
  %952 = vdwg.mxu0
  %v953 = vmax.f32 %v914, 0.0
  %v954 = vmax.f32 %v916, 0.0
  %v955 = vmax.f32 %v919, 0.0
  %v956 = vmax.f32 %v921, 0.0
  %v957 = vmax.f32 %v924, 0.0
  %v958 = vmax.f32 %v926, 0.0
  %v959 = vmax.f32 %v929, 0.0
  %v960 = vmax.f32 %v931, 0.0
  %v961 = vmax.f32 %v934, 0.0
  %v962 = vmax.f32 %v936, 0.0
  %v963 = vmax.f32 %v939, 0.0
  %v964 = vmax.f32 %v941, 0.0
  %v965 = vmax.f32 %v944, 0.0
  %v966 = vmax.f32 %v946, 0.0
  %v967 = vmax.f32 %v949, 0.0
  %v968 = vmax.f32 %v951, 0.0
  %v969 = vpack.c.bf16 %v954, %v953
  %v970 = vpack.c.bf16 %v956, %v955
  %v971 = vpack.c.bf16 %v958, %v957
  %v972 = vpack.c.bf16 %v960, %v959
  %v973 = vpack.c.bf16 %v962, %v961
  %v974 = vpack.c.bf16 %v964, %v963
  %v975 = vpack.c.bf16 %v966, %v965
  %v976 = vpack.c.bf16 %v968, %v967
  %v977 = vld [vmem:[%s8] sm:$0xf]
  %v978 = vld [vmem:[%s8 + $0x4] sm:$0xf]
  %v979 = vld [vmem:[%s8 + $0x8] sm:$0xf]
  %v980 = vld [vmem:[%s8 + $0xc] sm:$0xf]
  %v981 = vld [vmem:[%s8 + $0x10] sm:$0xf]
  %v982 = vld [vmem:[%s8 + $0x14] sm:$0xf]
  %v983 = vld [vmem:[%s8 + $0x18] sm:$0xf]
  %v984 = vld [vmem:[%s8 + $0x1c] sm:$0xf]
  %v985 = vld [vmem:[%s8 + $0x20] sm:$0xf]
  %v986 = vld [vmem:[%s8 + $0x24] sm:$0xf]
  %v987 = vld [vmem:[%s8 + $0x28] sm:$0xf]
  %v988 = vld [vmem:[%s8 + $0x2c] sm:$0xf]
  %v989 = vld [vmem:[%s8 + $0x30] sm:$0xf]
  %v990 = vld [vmem:[%s8 + $0x34] sm:$0xf]
  %v991 = vld [vmem:[%s8 + $0x38] sm:$0xf]
  %v992 = vld [vmem:[%s8 + $0x3c] sm:$0xf]
  %v993 = vld [vmem:[%s9] sm:$0x1]
  %v995 = vperm.slane %v993, 0
  %v1013 = vunpack.c.l.b16 %v977
  %v1014 = vunpack.c.l.b16 %v978
  %v1015 = vunpack.c.l.b16 %v979
  %v1016 = vunpack.c.l.b16 %v980
  %v1017 = vunpack.c.l.b16 %v981
  %v1018 = vunpack.c.l.b16 %v982
  %v1019 = vunpack.c.l.b16 %v983
  %v1020 = vunpack.c.l.b16 %v984
  %v1021 = vunpack.c.l.b16 %v985
  %v1022 = vunpack.c.l.b16 %v986
  %v1023 = vunpack.c.l.b16 %v987
  %v1024 = vunpack.c.l.b16 %v988
  %v1025 = vunpack.c.l.b16 %v989
  %v1026 = vunpack.c.l.b16 %v990
  %v1027 = vunpack.c.l.b16 %v991
  %v1028 = vunpack.c.l.b16 %v992
  %v1029 = vpack.c.b16 %v1014, %v1013
  %v1030 = vpack.c.b16 %v1016, %v1015
  %v1031 = vpack.c.b16 %v1018, %v1017
  %v1032 = vpack.c.b16 %v1020, %v1019
  %v1033 = vpack.c.b16 %v1022, %v1021
  %v1034 = vpack.c.b16 %v1024, %v1023
  %v1035 = vpack.c.b16 %v1026, %v1025
  %v1036 = vpack.c.b16 %v1028, %v1027
  %1045 = vmatpush.bf16.msra.mxu0 %v1036
  %1046 = vmatpush.bf16.msra.mxu0 %v1035
  %1047 = vmatpush.bf16.msra.mxu0 %v1034
  %1048 = vmatpush.bf16.msra.mxu0 %v1033
  %1049 = vmatpush.bf16.msra.mxu0 %v1032
  %1050 = vmatpush.bf16.msra.mxu0 %v1031
  %1051 = vmatpush.bf16.msra.mxu0 %v1030
  %1052 = vmatpush.bf16.msra.mxu0 %v1029
  %1053 = vmatmul.bf16.gmra.mxu0 %v969
  %v1054 = vpop.f32.mrf.mxu0
  %v1055 = vadd.f32 %v995, %v1054
  %v1056 = vpop.f32.mrf.mxu0
  %v1057 = vadd.f32 %v995, %v1056
  %1058 = vmatmul.bf16.gmra.mxu0 %v970
  %v1059 = vpop.f32.mrf.mxu0
  %v1060 = vadd.f32 %v995, %v1059
  %v1061 = vpop.f32.mrf.mxu0
  %v1062 = vadd.f32 %v995, %v1061
  %1063 = vmatmul.bf16.gmra.mxu0 %v971
  %v1064 = vpop.f32.mrf.mxu0
  %v1065 = vadd.f32 %v995, %v1064
  %v1066 = vpop.f32.mrf.mxu0
  %v1067 = vadd.f32 %v995, %v1066
  %1068 = vmatmul.bf16.gmra.mxu0 %v972
  %v1069 = vpop.f32.mrf.mxu0
  %v1070 = vadd.f32 %v995, %v1069
  %v1071 = vpop.f32.mrf.mxu0
  %v1072 = vadd.f32 %v995, %v1071
  %1073 = vmatmul.bf16.gmra.mxu0 %v973
  %v1074 = vpop.f32.mrf.mxu0
  %v1075 = vadd.f32 %v995, %v1074
  %v1076 = vpop.f32.mrf.mxu0
  %v1077 = vadd.f32 %v995, %v1076
  %1078 = vmatmul.bf16.gmra.mxu0 %v974
  %v1079 = vpop.f32.mrf.mxu0
  %v1080 = vadd.f32 %v995, %v1079
  %v1081 = vpop.f32.mrf.mxu0
  %v1082 = vadd.f32 %v995, %v1081
  %1083 = vmatmul.bf16.gmra.mxu0 %v975
  %v1084 = vpop.f32.mrf.mxu0
  %v1085 = vadd.f32 %v995, %v1084
  %v1086 = vpop.f32.mrf.mxu0
  %v1087 = vadd.f32 %v995, %v1086
  %1088 = vmatmul.bf16.gmra.mxu0 %v976
  %v1089 = vpop.f32.mrf.mxu0
  %v1090 = vadd.f32 %v995, %v1089
  %v1091 = vpop.f32.mrf.mxu0
  %v1092 = vadd.f32 %v995, %v1091
  %1093 = vdwg.mxu0
  %vm1094 = vcmp.gt.f32.partialorder %v1055, 0.0
  %vm1095 = vcmp.gt.f32.partialorder %v1057, 0.0
  %vm1096 = vcmp.gt.f32.partialorder %v1060, 0.0
  %vm1097 = vcmp.gt.f32.partialorder %v1062, 0.0
  %vm1098 = vcmp.gt.f32.partialorder %v1065, 0.0
  %vm1099 = vcmp.gt.f32.partialorder %v1067, 0.0
  %vm1100 = vcmp.gt.f32.partialorder %v1070, 0.0
  %vm1101 = vcmp.gt.f32.partialorder %v1072, 0.0
  %vm1102 = vcmp.gt.f32.partialorder %v1075, 0.0
  %vm1103 = vcmp.gt.f32.partialorder %v1077, 0.0
  %vm1104 = vcmp.gt.f32.partialorder %v1080, 0.0
  %vm1105 = vcmp.gt.f32.partialorder %v1082, 0.0
  %vm1106 = vcmp.gt.f32.partialorder %v1085, 0.0
  %vm1107 = vcmp.gt.f32.partialorder %v1087, 0.0
  %vm1108 = vcmp.gt.f32.partialorder %v1090, 0.0
  %vm1109 = vcmp.gt.f32.partialorder %v1092, 0.0
  %v1110 = vmul.f32 %v1055, 0.2
  %v1111 = vmul.f32 %v1057, 0.2
  %v1112 = vmul.f32 %v1060, 0.2
  %v1113 = vmul.f32 %v1062, 0.2
  %v1114 = vmul.f32 %v1065, 0.2
  %v1115 = vmul.f32 %v1067, 0.2
  %v1116 = vmul.f32 %v1070, 0.2
  %v1117 = vmul.f32 %v1072, 0.2
  %v1118 = vmul.f32 %v1075, 0.2
  %v1119 = vmul.f32 %v1077, 0.2
  %v1120 = vmul.f32 %v1080, 0.2
  %v1121 = vmul.f32 %v1082, 0.2
  %v1122 = vmul.f32 %v1085, 0.2
  %v1123 = vmul.f32 %v1087, 0.2
  %v1124 = vmul.f32 %v1090, 0.2
  %v1125 = vmul.f32 %v1092, 0.2
  %v1126 = vsel %vm1094, %v1055, %v1110
  %v1127 = vsel %vm1095, %v1057, %v1111
  %v1128 = vsel %vm1096, %v1060, %v1112
  %v1129 = vsel %vm1097, %v1062, %v1113
  %v1130 = vsel %vm1098, %v1065, %v1114
  %v1131 = vsel %vm1099, %v1067, %v1115
  %v1132 = vsel %vm1100, %v1070, %v1116
  %v1133 = vsel %vm1101, %v1072, %v1117
  %v1134 = vsel %vm1102, %v1075, %v1118
  %v1135 = vsel %vm1103, %v1077, %v1119
  %v1136 = vsel %vm1104, %v1080, %v1120
  %v1137 = vsel %vm1105, %v1082, %v1121
  %v1138 = vsel %vm1106, %v1085, %v1122
  %v1139 = vsel %vm1107, %v1087, %v1123
  %v1140 = vsel %vm1108, %v1090, %v1124
  %v1141 = vsel %vm1109, %v1092, %v1125
  %1142 = vst [vmem:[%s10] sm:$0xff] %v1126
  %1143 = vst [vmem:[%s10 + $0x8] sm:$0xff] %v1127
  %1144 = vst [vmem:[%s10 + $0x10] sm:$0xff] %v1128
  %1145 = vst [vmem:[%s10 + $0x18] sm:$0xff] %v1129
  %1146 = vst [vmem:[%s10 + $0x20] sm:$0xff] %v1130
  %1147 = vst [vmem:[%s10 + $0x28] sm:$0xff] %v1131
  %1148 = vst [vmem:[%s10 + $0x30] sm:$0xff] %v1132
  %1149 = vst [vmem:[%s10 + $0x38] sm:$0xff] %v1133
  %1150 = vst [vmem:[%s10 + $0x40] sm:$0xff] %v1134
  %1151 = vst [vmem:[%s10 + $0x48] sm:$0xff] %v1135
  %1152 = vst [vmem:[%s10 + $0x50] sm:$0xff] %v1136
  %1153 = vst [vmem:[%s10 + $0x58] sm:$0xff] %v1137
  %1154 = vst [vmem:[%s10 + $0x60] sm:$0xff] %v1138
  %1155 = vst [vmem:[%s10 + $0x68] sm:$0xff] %v1139
  %1156 = vst [vmem:[%s10 + $0x70] sm:$0xff] %v1140
  %1157 = vst [vmem:[%s10 + $0x78] sm:$0xff] %v1141
  // Predicated region
  $region42: #{gcn_forward.1} parent=0 // pred_check
    _
  $region43: #{gcn_forward.1} parent=0 // pred_check_branch
    %1159 = sbr.rel (0) target = $region45
  $region44: #{gcn_forward.1} parent=0 // pred_region
    _
  $region45: #{gcn_forward.1} parent=0 // pred_fallthru
    _
  // Predicated region
  $region46: #{gcn_forward.1} parent=0 // pred_check
    _
  $region47: #{gcn_forward.1} parent=0 // pred_check_branch
    %1161 = sbr.rel (0) target = $region49
  $region48: #{gcn_forward.1} parent=0 // pred_region
    _
  $region49: #{gcn_forward.1} parent=0 // pred_fallthru
    _

</llo_original>
